<compile_context>
chip_gen: v5e
topology: v5e:2x2
jax: 0.10.0
libtpu: 0.0.40
codegen_flags: <defaults>
</compile_context>

<pallas_src>
import functools

import jax
import jax.numpy as jnp
from jax import lax
from jax.experimental import pallas as pl
from jax.experimental.pallas import tpu as pltpu


def _kg_loss_kernel(x_ref, e_ref, t_ref, out_ref, *, eps):
    # x_ref: (Bt, K, D)  e_ref: (K, D)  t_ref: (Bt, K)  out_ref: (Bt, 1)
    x = x_ref[...].astype(jnp.float32)            # cast in-kernel (VMEM), not on host
    e = e_ref[...].astype(jnp.float32)
    t = t_ref[...].astype(jnp.float32)

    Bt, K, D = x.shape

    # scores[b, i, j] = x[b, i, :] . e[j, :]  -- one fused MXU matmul per block,
    # contracting over D (no host-side transpose of the embedding table).
    s = lax.dot_general(
        x.reshape(Bt * K, D), e,
        dimension_numbers=(((1,), (1,)), ((), ())),
        preferred_element_type=jnp.float32)        # (Bt*K, K)
    s3 = s.reshape(Bt, K, K)                       # (b, i, j)

    # CrossEntropy over the class axis i (PyTorch CE on dim=1), per (b, j).
    m = jnp.max(s3, axis=1)                                        # (Bt, K)
    lse = jnp.log(jnp.sum(jnp.exp(s3 - m[:, None, :]), axis=1)) + m  # (Bt, K)

    # diag[b, j] = scores[b, j, j] = x[b, j, :] . e[j, :]
    diag = jnp.sum(x * e[None, :, :], axis=-1)                     # (Bt, K)

    ce = lse - diag                                                # (Bt, K)

    num = jnp.sum(ce * t, axis=-1, keepdims=True) * (1.0 / K)      # mean over j
    den = jnp.sum(t, axis=-1, keepdims=True) + jnp.float32(eps)
    out_ref[...] = num / den                                       # (Bt, 1)


def knowledge_guide_loss(inputs, knowledge_embeds, targets, eps=1e-8,
                         block_batch=128):
    B, K, D = inputs.shape
    assert knowledge_embeds.shape == (K, D)
    assert targets.shape == (B, K)

    # Batch tile: big enough to amortize per-step overhead, tiny vs. VMEM even
    # on v7x (2 buffers * Bt*K*D*4B  <<  32 MiB for the default block_batch).
    Bt = min(block_batch, B)
    G = (B + Bt - 1) // Bt
    B_pad = G * Bt
    if B_pad != B:
        pad = B_pad - B
        # Zero-padded batches contribute exactly 0 to the loss (targets == 0).
        inputs = jnp.pad(inputs, ((0, pad), (0, 0), (0, 0)))
        targets = jnp.pad(targets, ((0, pad), (0, 0)))

    itemsize_x = jnp.dtype(inputs.dtype).itemsize
    itemsize_e = jnp.dtype(knowledge_embeds.dtype).itemsize
    itemsize_t = jnp.dtype(targets.dtype).itemsize
    cost = pl.CostEstimate(
        flops=2 * B_pad * K * K * D + 2 * B_pad * K * D,
        transcendentals=B_pad * K * K + B_pad * K,
        bytes_accessed=(B_pad * K * D * itemsize_x
                        + K * D * itemsize_e
                        + B_pad * K * itemsize_t
                        + B_pad * 4),
    )

    per_batch = pl.pallas_call(
        functools.partial(_kg_loss_kernel, eps=eps),
        out_shape=jax.ShapeDtypeStruct((B_pad, 1), jnp.float32),
        grid_spec=pltpu.PrefetchScalarGridSpec(
            num_scalar_prefetch=0,
            grid=(G,),
            in_specs=[
                pl.BlockSpec((Bt, K, D), lambda g: (g, 0, 0)),   # inputs tile
                pl.BlockSpec((K, D), lambda g: (0, 0)),          # embeds (resident)
                pl.BlockSpec((Bt, K), lambda g: (g, 0)),         # targets tile
            ],
            out_specs=pl.BlockSpec((Bt, 1), lambda g: (g, 0)),   # per-batch loss
        ),
        compiler_params=pltpu.CompilerParams(
            dimension_semantics=("parallel",)),                  # shards over TCs
        cost_estimate=cost,
    )(inputs, knowledge_embeds, targets)

    # Tiny final reduction in the wrapper (padded rows are exactly 0).
    return jnp.sum(per_batch) / jnp.float32(B)


def reference(inputs, knowledge_embeds, targets, eps=1e-8):
    scores = jnp.einsum("bid,jd->bij", inputs, knowledge_embeds)    # (B, K, K)
    lse = jax.nn.logsumexp(scores, axis=1)                          # (B, K)
    diag = jnp.diagonal(scores, axis1=1, axis2=2)                   # (B, K)
    ce = lse - diag
    return jnp.mean(jnp.mean(ce * targets, axis=-1)
                    / (jnp.sum(targets, axis=-1) + eps))


if __name__ == "__main__":
    key = jax.random.PRNGKey(0)
    k1, k2, k3 = jax.random.split(key, 3)

    B, K, D = 20, 8, 32   # batch, num knowledge items, embed dim
    inputs = jax.random.normal(k1, (B, K, D), dtype=jnp.float32)
    knowledge_embeds = jax.random.normal(k2, (K, D), dtype=jnp.float32)
    targets = (jax.random.uniform(k3, (B, K)) > 0.5).astype(jnp.float32)

    # Small block_batch here to exercise the multi-block (grid > 1) + padding
    # paths; production use keeps the default block_batch=128.
    loss = knowledge_guide_loss(inputs, knowledge_embeds, targets, block_batch=8)
    loss = jax.block_until_ready(loss)

    ref = reference(inputs, knowledge_embeds, targets)
    assert jnp.allclose(loss, ref, atol=1e-5, rtol=1e-5), (loss, ref)
    print("KERNEL_OK")
</pallas_src>

<mosaic_0001>
module attributes {stable_mosaic.version = 11 : i64} {
  func.func @_kg_loss_kernel(%arg0: i32, %arg1: memref<8x8x32xf32, #tpu.memory_space<vmem>>, %arg2: memref<8x32xf32, #tpu.memory_space<vmem>>, %arg3: memref<8x8xf32, #tpu.memory_space<vmem>>, %arg4: memref<8x1xf32, #tpu.memory_space<vmem>>) attributes {dimension_semantics = [#tpu.dimension_semantics<parallel>], iteration_bounds = array<i64: 3>, scalar_prefetch = 0 : i64, scratch_operands = 0 : i64, tpu.core_type = #tpu.core_type<tc>, window_params = [{transform_indices = @transform_0, window_bounds = array<i64: 8, 8, 32>}, {pipeline_mode = #tpu.pipeline_mode<synchronous>, transform_indices = @transform_1, window_bounds = array<i64: 8, 32>}, {transform_indices = @transform_2, window_bounds = array<i64: 8, 8>}, {transform_indices = @transform_3, window_bounds = array<i64: 8, 1>}]} {
    %c0 = arith.constant 0 : index
    %c0_0 = arith.constant 0 : index
    %c0_1 = arith.constant 0 : index
    %0 = vector.load %arg1[%c0, %c0_0, %c0_1] : memref<8x8x32xf32, #tpu.memory_space<vmem>>, vector<8x8x32xf32>
    %c0_2 = arith.constant 0 : index
    %c0_3 = arith.constant 0 : index
    %1 = vector.load %arg2[%c0_2, %c0_3] : memref<8x32xf32, #tpu.memory_space<vmem>>, vector<8x32xf32>
    %c0_4 = arith.constant 0 : index
    %c0_5 = arith.constant 0 : index
    %2 = vector.load %arg3[%c0_4, %c0_5] : memref<8x8xf32, #tpu.memory_space<vmem>>, vector<8x8xf32>
    %3 = vector.shape_cast %0 : vector<8x8x32xf32> to vector<64x32xf32>
    %cst = arith.constant dense<0.000000e+00> : vector<64x8xf32>
    %4 = tpu.matmul %3, %1, %cst {dimension_numbers = #tpu.dot_dimension_numbers<[1], [1], [0], [0], [0, 0, 1, 0], [], []>} : vector<64x32xf32>, vector<8x32xf32>, vector<64x8xf32> -> vector<64x8xf32>
    %5 = vector.shape_cast %4 : vector<64x8xf32> to vector<8x8x8xf32>
    %cst_6 = arith.constant dense<0xFF800000> : vector<8x8xf32>
    %6 = vector.multi_reduction <maximumf>, %5, %cst_6 [1] : vector<8x8x8xf32> to vector<8x8xf32>
    %7 = vector.shape_cast %6 : vector<8x8xf32> to vector<8x1x8xf32>
    %8 = vector.broadcast %7 : vector<8x1x8xf32> to vector<8x8x8xf32>
    %9 = arith.subf %5, %8 : vector<8x8x8xf32>
    %10 = math.exp %9 : vector<8x8x8xf32>
    %cst_7 = arith.constant dense<0.000000e+00> : vector<8x8xf32>
    %11 = vector.multi_reduction <add>, %10, %cst_7 [1] : vector<8x8x8xf32> to vector<8x8xf32>
    %12 = math.log %11 : vector<8x8xf32>
    %13 = arith.addf %12, %6 : vector<8x8xf32>
    %14 = vector.shape_cast %1 : vector<8x32xf32> to vector<1x8x32xf32>
    %15 = vector.broadcast %14 : vector<1x8x32xf32> to vector<8x8x32xf32>
    %16 = arith.mulf %0, %15 : vector<8x8x32xf32>
    %cst_8 = arith.constant dense<0.000000e+00> : vector<8x8xf32>
    %17 = vector.multi_reduction <add>, %16, %cst_8 [2] : vector<8x8x32xf32> to vector<8x8xf32>
    %18 = arith.subf %13, %17 : vector<8x8xf32>
    %19 = arith.mulf %18, %2 : vector<8x8xf32>
    %cst_9 = arith.constant dense<0.000000e+00> : vector<8xf32>
    %20 = vector.multi_reduction <add>, %19, %cst_9 [1] : vector<8x8xf32> to vector<8xf32>
    %21 = vector.shape_cast %20 : vector<8xf32> to vector<8x1xf32>
    %cst_10 = arith.constant 1.250000e-01 : f32
    %22 = vector.broadcast %cst_10 : f32 to vector<8x1xf32>
    %23 = arith.mulf %21, %22 : vector<8x1xf32>
    %cst_11 = arith.constant dense<0.000000e+00> : vector<8xf32>
    %24 = vector.multi_reduction <add>, %2, %cst_11 [1] : vector<8x8xf32> to vector<8xf32>
    %25 = vector.shape_cast %24 : vector<8xf32> to vector<8x1xf32>
    %cst_12 = arith.constant 9.99999993E-9 : f32
    %26 = vector.broadcast %cst_12 : f32 to vector<8x1xf32>
    %27 = arith.addf %25, %26 : vector<8x1xf32>
    %28 = arith.divf %23, %27 : vector<8x1xf32>
    %c0_13 = arith.constant 0 : index
    %c0_14 = arith.constant 0 : index
    %29 = vector.load %arg4[%c0_13, %c0_14] : memref<8x1xf32, #tpu.memory_space<vmem>>, vector<8x1xf32>
    tpu.vector_store %arg4[%c0_13, %c0_14], %28 {strides = array<i32>} : memref<8x1xf32, #tpu.memory_space<vmem>>, vector<8x1xf32>,
    return
  }
  func.func @transform_0(%arg0: i32) -> (i32, i32, i32) {
    %c0_i32 = arith.constant 0 : i32
    %c0_i32_0 = arith.constant 0 : i32
    %c0_i32_1 = arith.constant 0 : i32
    return %arg0, %c0_i32, %c0_i32_0 : i32, i32, i32
  }
  func.func @transform_1(%arg0: i32) -> (i32, i32) {
    %c0_i32 = arith.constant 0 : i32
    %c0_i32_0 = arith.constant 0 : i32
    %c0_i32_1 = arith.constant 0 : i32
    return %c0_i32, %c0_i32_0 : i32, i32
  }
  func.func @transform_2(%arg0: i32) -> (i32, i32) {
    %c0_i32 = arith.constant 0 : i32
    %c0_i32_0 = arith.constant 0 : i32
    return %arg0, %c0_i32 : i32, i32
  }
  func.func @transform_3(%arg0: i32) -> (i32, i32) {
    %c0_i32 = arith.constant 0 : i32
    %c0_i32_0 = arith.constant 0 : i32
    return %arg0, %c0_i32 : i32, i32
  }
}

</mosaic_0001>

<llo_original>
// kernel: tpu_custom_call.1
$region0: #{tpu_custom_call.1}
  #allocation0 [shape = 'u32[]', space=smem, size = 0x4, offset = 0x4, fixed_abs, tag = 'smem constant byte address 0x4 - core index']
  #allocation1 [shape = 'u32[72,128]{1,0:T(1,128)}', space=vmem, size = 0x9000, scoped, tag = 'internal scratch']
  %s0 = inlined_call_operand.hbm [shape: f32[24,8,32], index: 0, kind: input, shape index: {}]
  %s1 = inlined_call_operand.vmem [shape: f32[8,32], index: 1, kind: input, shape index: {}]
  %s2 = inlined_call_operand.vmem [shape: f32[24,8], index: 2, kind: input, shape index: {}]
  %s3 = inlined_call_operand.vmem [shape: f32[24,1], index: 3, kind: output, shape index: {}]
  %s4 = sld [smem:[#allocation0]]
  $region49: #{tpu_custom_call.1} parent=0
    _
  %s6 = ssub.s32 1, %s4
  %s7 = scalar_select 0, %s6, %s4
  $region1: #{tpu_custom_call.1} parent=0
    #allocation2 [shape = 'u8[65536]{0}', space=vmem, size = 0x10000, scoped, tag = 'input window, operand 0']
    #allocation3 [shape = 's32[2]{0}', space=sflag, size = 0x8, scoped, tag = 'scoped memory for tpu_custom_call.1']
    %8 = vsyncpa [#allocation3], 0
    %s9 = scalar_lea.sflag [#allocation3], 1
    %10 = vsyncpa %s9, 0
    loop: start=0, step=1, limit=5
    $region2: #{tpu_custom_call.1} parent=1 // loop_pre_header
      _
    $region3: #{tpu_custom_call.1} parent=1 // loop_header
      %s12 = sphi 0, %s16
      %p13 = scmp.ge.s32.totalorder %s12, 5
      %s22 = sphi 0, %s24
      %s25 = sphi 0, %s22
      %s26 = sphi 0, %s25
      %s42 = sphi 0, %s26
      %s46 = sphi 0, %s46
      %s48 = sphi 0, %s46
      %s49 = sphi 0, %s48
      %s63 = sphi 0, %s49
      %s69 = sphi 0, %s71
      %s72 = sphi 0, %s69
      %s73 = sphi 0, %s72
      %s89 = sphi 0, %s73
      %s95 = sphi 0, %s97
      %s98 = sphi 0, %s95
      %s99 = sphi 0, %s98
      %s115 = sphi 0, %s99
    $region4: #{tpu_custom_call.1} parent=1 // loop_header_branch
      %15 = sbr.rel (%p13) target = $region8
    $region5: #{tpu_custom_call.1} parent=1 // loop_body
      %s17 = ssub.s32 %s12, 1
      %s18 = ssub.s32 %s12, 2
      %s19 = sadd.s32 %s12, 1
      %s20 = ssub.s32 %s12, %s19
      %p21 = scmp.eq.s32.totalorder %s20, 0
      %s23 = sadd.s32 %s22, 1
      %s24 = scalar_select %p21, %s22, %s23
      %p27 = pneg %p21
      %p28 = scmp.eq.s32.totalorder %s12, 2
      %p29 = por %p27, %p28
      %p30 = scmp.ne.s32.totalorder %s22, %s25
      %p31 = scmp.eq.s32.totalorder %s12, 0
      %p32 = por %p30, %p31
      %p33 = scmp.ne.s32.totalorder %s22, %s25
      %p34 = scmp.eq.s32.totalorder %s17, 2
      %p35 = por %p33, %p34
      %p36 = scmp.ne.s32.totalorder %s25, %s26
      %p37 = scmp.eq.s32.totalorder %s17, 0
      %p38 = por %p36, %p37
      %p39 = scmp.ne.s32.totalorder %s25, %s26
      %p40 = scmp.eq.s32.totalorder %s18, 2
      %p41 = por %p39, %p40
      %p43 = scmp.ne.s32.totalorder %s26, %s42
      %p44 = scmp.eq.s32.totalorder %s18, 0
      %p45 = por %p43, %p44
      %s47 = sadd.s32 %s46, 1
      %p50 = scmp.eq.s32.totalorder %s12, 2
      %p51 = scmp.ne.s32.totalorder %s46, %s48
      %p52 = scmp.eq.s32.totalorder %s12, 0
      %p53 = por %p51, %p52
      %p54 = scmp.ne.s32.totalorder %s46, %s48
      %p55 = scmp.eq.s32.totalorder %s17, 2
      %p56 = por %p54, %p55
      %p57 = scmp.ne.s32.totalorder %s48, %s49
      %p58 = scmp.eq.s32.totalorder %s17, 0
      %p59 = por %p57, %p58
      %p60 = scmp.ne.s32.totalorder %s48, %s49
      %p61 = scmp.eq.s32.totalorder %s18, 2
      %p62 = por %p60, %p61
      %p64 = scmp.ne.s32.totalorder %s49, %s63
      %p65 = scmp.eq.s32.totalorder %s18, 0
      %p66 = por %p64, %p65
      %s67 = ssub.s32 %s12, %s19
      %p68 = scmp.eq.s32.totalorder %s67, 0
      %s70 = sadd.s32 %s69, 1
      %s71 = scalar_select %p68, %s69, %s70
      %p74 = pneg %p68
      %p75 = scmp.eq.s32.totalorder %s12, 2
      %p76 = por %p74, %p75
      %p77 = scmp.ne.s32.totalorder %s69, %s72
      %p78 = scmp.eq.s32.totalorder %s12, 0
      %p79 = por %p77, %p78
      %p80 = scmp.ne.s32.totalorder %s69, %s72
      %p81 = scmp.eq.s32.totalorder %s17, 2
      %p82 = por %p80, %p81
      %p83 = scmp.ne.s32.totalorder %s72, %s73
      %p84 = scmp.eq.s32.totalorder %s17, 0
      %p85 = por %p83, %p84
      %p86 = scmp.ne.s32.totalorder %s72, %s73
      %p87 = scmp.eq.s32.totalorder %s18, 2
      %p88 = por %p86, %p87
      %p90 = scmp.ne.s32.totalorder %s73, %s89
      %p91 = scmp.eq.s32.totalorder %s18, 0
      %p92 = por %p90, %p91
      %s93 = ssub.s32 %s12, %s19
      %p94 = scmp.eq.s32.totalorder %s93, 0
      %s96 = sadd.s32 %s95, 1
      %s97 = scalar_select %p94, %s95, %s96
      %p100 = pneg %p94
      %p101 = scmp.eq.s32.totalorder %s12, 2
      %p102 = por %p100, %p101
      %p103 = scmp.ne.s32.totalorder %s95, %s98
      %p104 = scmp.eq.s32.totalorder %s12, 0
      %p105 = por %p103, %p104
      %p106 = scmp.ne.s32.totalorder %s95, %s98
      %p107 = scmp.eq.s32.totalorder %s17, 2
      %p108 = por %p106, %p107
      %p109 = scmp.ne.s32.totalorder %s98, %s99
      %p110 = scmp.eq.s32.totalorder %s17, 0
      %p111 = por %p109, %p110
      %p112 = scmp.ne.s32.totalorder %s98, %s99
      %p113 = scmp.eq.s32.totalorder %s18, 2
      %p114 = por %p112, %p113
      %p116 = scmp.ne.s32.totalorder %s99, %s115
      %p117 = scmp.eq.s32.totalorder %s18, 0
      %p118 = por %p116, %p117
      %p119 = scmp.le.s32.totalorder 1, %s12
      %p120 = scmp.lt.s32.totalorder %s12, 4
      %p121 = pnand %p119, %p120
      %p122 = pneg %p121
      // Predicated region
      $region9: #{tpu_custom_call.1} parent=5 // pred_check
        _
      $region10: #{tpu_custom_call.1} parent=5 // pred_check_branch
        %124 = sbr.rel (%p121) target = $region12
      $region11: #{tpu_custom_call.1} parent=5 // pred_region
        %s125 = ssub.s32 %s12, 1
        // Predicated region
        $region13: #{tpu_custom_call.1} parent=11 // pred_check
          %p126 = pneg %p59
        $region14: #{tpu_custom_call.1} parent=11 // pred_check_branch
          %128 = sbr.rel (%p126) target = $region16
        $region15: #{tpu_custom_call.1} parent=11 // pred_region
          _
        $region16: #{tpu_custom_call.1} parent=11 // pred_fallthru
          _
      $region12: #{tpu_custom_call.1} parent=5 // pred_fallthru
        _
      %p129 = scmp.lt.s32.totalorder %s12, 3
      // Predicated region
      $region17: #{tpu_custom_call.1} parent=5 // pred_check
        %p130 = pneg %p129
      $region18: #{tpu_custom_call.1} parent=5 // pred_check_branch
        %132 = sbr.rel (%p130) target = $region20
      $region19: #{tpu_custom_call.1} parent=5 // pred_region
        // Predicated region
        $region21: #{tpu_custom_call.1} parent=19 // pred_check
          %p133 = pneg %p32
        $region22: #{tpu_custom_call.1} parent=19 // pred_check_branch
          %135 = sbr.rel (%p133) target = $region24
        $region23: #{tpu_custom_call.1} parent=19 // pred_region
          %s136 = sand.u32 %s22, 1
          %s137 = scalar_lea.sflag [#allocation3], %s136
          %s138 = sand.u32 %s22, 1
          %s139 = smul.addr %s138, 64
          %s140 = scalar_lea.vmem [#allocation2], %s139
          %s141 = smul.u32 8, %s12
          %143 = vsyncadd %s137, 0
          %s144 = smul.addr %s141, 8
          %s145 = scalar_lea.hbm %s0, %s144
          %s146 = sshll.u32 %s145, 4
          %s147 = int_to_ptr.hbm [resolvable:$true] %s146
          %s148 = sshll.u32 %s140, 4
          %s149 = int_to_ptr.vmem [resolvable:$true] %s148
          %154 = dma.hbm_to_vmem [thread:$0]  %s147, 1024, %s149, %s137, 128, 128, 8
        $region24: #{tpu_custom_call.1} parent=19 // pred_fallthru
          _
        // Predicated region
        $region25: #{tpu_custom_call.1} parent=19 // pred_check
          %p155 = pneg %p79
        $region26: #{tpu_custom_call.1} parent=19 // pred_check_branch
          %157 = sbr.rel (%p155) target = $region28
        $region27: #{tpu_custom_call.1} parent=19 // pred_region
          %p158 = scmp.lt.s32.totalorder %s12, 2
          %s159 = scalar_select %p158, %s12, 2
          %s160 = smul.addr %s159, 8
          %s161 = scalar_lea.vmem %s2, %s160
        $region28: #{tpu_custom_call.1} parent=19 // pred_fallthru
          _
      $region20: #{tpu_custom_call.1} parent=5 // pred_fallthru
        _
      %p162 = scmp.le.s32.totalorder 1, %s12
      %p163 = scmp.lt.s32.totalorder %s12, 4
      %p164 = pnand %p162, %p163
      %p165 = pneg %p164
      // Predicated region
      $region29: #{tpu_custom_call.1} parent=5 // pred_check
        _
      $region30: #{tpu_custom_call.1} parent=5 // pred_check_branch
        %167 = sbr.rel (%p164) target = $region32
      $region31: #{tpu_custom_call.1} parent=5 // pred_region
        %s168 = ssub.s32 %s12, 1
        %s169 = sand.u32 %s25, 1
        %s170 = scalar_lea.sflag [#allocation3], %s169
        %s171 = sand.u32 %s25, 1
        %s172 = smul.addr %s171, 64
        %s173 = scalar_lea.vmem [#allocation2], %s172
        // Predicated region
        $region33: #{tpu_custom_call.1} parent=31 // pred_check
          %p174 = pneg %p38
        $region34: #{tpu_custom_call.1} parent=31 // pred_check_branch
          %176 = sbr.rel (%p174) target = $region36
        $region35: #{tpu_custom_call.1} parent=31 // pred_region
          %178 = dma.done %s170, 1024
        $region36: #{tpu_custom_call.1} parent=31 // pred_fallthru
          _
        %s179 = sand.u32 %s25, 1
        %s180 = scalar_lea.sflag [#allocation3], %s179
        %s181 = sand.u32 %s25, 1
        %s182 = smul.addr %s181, 64
        %s183 = scalar_lea.vmem [#allocation2], %s182
        %p184 = pneg %p38
        %p185 = pneg %p35
        %p186 = pneg %p59
        %p187 = pneg %p56
        %p188 = scmp.lt.s32.totalorder %s17, 2
        %s189 = scalar_select %p188, %s17, 2
        %s190 = smul.addr %s189, 8
        %s191 = scalar_lea.vmem %s2, %s190
        %p192 = pneg %p85
        %p193 = pneg %p82
        %p194 = pneg %p111
        %p195 = pneg %p108
        %p196 = scmp.lt.s32.totalorder %s17, 2
        %s197 = scalar_select %p196, %s17, 2
        %s198 = smul.addr %s197, 8
        %s199 = scalar_lea.vmem %s3, %s198
        %s200 = smul.u32 8, %s17
        %p201 = scmp.lt.s32.totalorder %s17, 2
        %s202 = scalar_select %p201, %s17, 2
        %s203 = smul.addr %s202, 8
        %s204 = scalar_lea.vmem %s2, %s203
        %p205 = scmp.lt.s32.totalorder %s17, 2
        %s206 = scalar_select %p205, %s17, 2
        %s207 = smul.addr %s206, 8
        %s208 = scalar_lea.vmem %s3, %s207
        %v209 = vld [vmem:[%s173] sm:$0xff]
        %v210 = vld [vmem:[%s173 + $0x8] sm:$0xff]
        %v211 = vld [vmem:[%s173 + $0x10] sm:$0xff]
        %v212 = vld [vmem:[%s173 + $0x18] sm:$0xff]
        %v213 = vld [vmem:[%s173 + $0x20] sm:$0xff]
        %v214 = vld [vmem:[%s173 + $0x28] sm:$0xff]
        %v215 = vld [vmem:[%s173 + $0x30] sm:$0xff]
        %v216 = vld [vmem:[%s173 + $0x38] sm:$0xff]
        %v217 = vld [vmem:[%s1] sm:$0xff]
        %v218 = vld [vmem:[%s204] sm:$0xff]
        %vm219 = vcmask 261120
        %v221 = vsel %vm219, %v209, 0
        %v224 = vsel %vm219, %v210, 0
        %v227 = vsel %vm219, %v211, 0
        %v230 = vsel %vm219, %v212, 0
        %v233 = vsel %vm219, %v213, 0
        %v236 = vsel %vm219, %v214, 0
        %v239 = vsel %vm219, %v215, 0
        %v242 = vsel %vm219, %v216, 0
        %v245 = vsel %vm219, %v217, 0
        %247 = vmatpush.xpose.msra.mxu0 0.0
        %248 = vmatpush.xpose.msra.mxu0 0.0
        %249 = vmatpush.xpose.msra.mxu0 0.0
        %250 = vmatpush.xpose.msra.mxu0 0.0
        %251 = vmatpush.xpose.msra.mxu0 0.0
        %252 = vmatpush.xpose.msra.mxu0 0.0
        %253 = vmatpush.xpose.msra.mxu0 0.0
        %254 = vmatpush.xpose.msra.mxu0 0.0
        %255 = vmatpush.xpose.msra.mxu0 0.0
        %256 = vmatpush.xpose.msra.mxu0 0.0
        %257 = vmatpush.xpose.msra.mxu0 0.0
        %258 = vmatpush.xpose.msra.mxu0 0.0
        %259 = vmatpush.xpose.msra.mxu0 0.0
        %260 = vmatpush.xpose.msra.mxu0 0.0
        %261 = vmatpush.xpose.msra.mxu0 0.0
        %262 = vmatpush.xpose.msra.mxu0 %v245
        %263 = vmatmul.f32.gmra.mxu0 %v221
        %v264 = vpop.f32.mrf.mxu0
        %v265 = vadd.f32 0.0, %v264
        %266 = vmatmul.f32.gmra.mxu0 %v224
        %v267 = vpop.f32.mrf.mxu0
        %v268 = vadd.f32 0.0, %v267
        %269 = vmatmul.f32.gmra.mxu0 %v227
        %v270 = vpop.f32.mrf.mxu0
        %v271 = vadd.f32 0.0, %v270
        %272 = vmatmul.f32.gmra.mxu0 %v230
        %v273 = vpop.f32.mrf.mxu0
        %v274 = vadd.f32 0.0, %v273
        %275 = vmatmul.f32.gmra.mxu0 %v233
        %v276 = vpop.f32.mrf.mxu0
        %v277 = vadd.f32 0.0, %v276
        %278 = vmatmul.f32.gmra.mxu0 %v236
        %v279 = vpop.f32.mrf.mxu0
        %v280 = vadd.f32 0.0, %v279
        %281 = vmatmul.f32.gmra.mxu0 %v239
        %v282 = vpop.f32.mrf.mxu0
        %v283 = vadd.f32 0.0, %v282
        %284 = vmatmul.f32.gmra.mxu0 %v242
        %v285 = vpop.f32.mrf.mxu0
        %v286 = vadd.f32 0.0, %v285
        %287 = vdwg.mxu0
        %vm288 = vcmask 64512
        %v289 = vsel %vm288, %v265, -inf
        %v290 = vrot.slane %v289, 4
        %v291 = vmax.f32 %v289, %v290
        %v292 = vrot.slane %v291, 2
        %v293 = vmax.f32 %v291, %v292
        %v294 = vrot.slane %v293, 1
        %v295 = vmax.f32 %v293, %v294
        %v296 = vsel %vm288, %v268, -inf
        %v297 = vrot.slane %v296, 4
        %v298 = vmax.f32 %v296, %v297
        %v299 = vrot.slane %v298, 2
        %v300 = vmax.f32 %v298, %v299
        %v301 = vrot.slane %v300, 1
        %v302 = vmax.f32 %v300, %v301
        %v303 = vsel %vm288, %v271, -inf
        %v304 = vrot.slane %v303, 4
        %v305 = vmax.f32 %v303, %v304
        %v306 = vrot.slane %v305, 2
        %v307 = vmax.f32 %v305, %v306
        %v308 = vrot.slane %v307, 1
        %v309 = vmax.f32 %v307, %v308
        %v310 = vsel %vm288, %v274, -inf
        %v311 = vrot.slane %v310, 4
        %v312 = vmax.f32 %v310, %v311
        %v313 = vrot.slane %v312, 2
        %v314 = vmax.f32 %v312, %v313
        %v315 = vrot.slane %v314, 1
        %v316 = vmax.f32 %v314, %v315
        %v317 = vsel %vm288, %v277, -inf
        %v318 = vrot.slane %v317, 4
        %v319 = vmax.f32 %v317, %v318
        %v320 = vrot.slane %v319, 2
        %v321 = vmax.f32 %v319, %v320
        %v322 = vrot.slane %v321, 1
        %v323 = vmax.f32 %v321, %v322
        %v324 = vsel %vm288, %v280, -inf
        %v325 = vrot.slane %v324, 4
        %v326 = vmax.f32 %v324, %v325
        %v327 = vrot.slane %v326, 2
        %v328 = vmax.f32 %v326, %v327
        %v329 = vrot.slane %v328, 1
        %v330 = vmax.f32 %v328, %v329
        %v331 = vsel %vm288, %v283, -inf
        %v332 = vrot.slane %v331, 4
        %v333 = vmax.f32 %v331, %v332
        %v334 = vrot.slane %v333, 2
        %v335 = vmax.f32 %v333, %v334
        %v336 = vrot.slane %v335, 1
        %v337 = vmax.f32 %v335, %v336
        %v338 = vsel %vm288, %v286, -inf
        %v339 = vrot.slane %v338, 4
        %v340 = vmax.f32 %v338, %v339
        %v341 = vrot.slane %v340, 2
        %v342 = vmax.f32 %v340, %v341
        %v343 = vrot.slane %v342, 1
        %v344 = vmax.f32 %v342, %v343
        %v345 = vsub.f32 %v265, %v295
        %v346 = vsub.f32 %v268, %v302
        %v347 = vsub.f32 %v271, %v309
        %v348 = vsub.f32 %v274, %v316
        %v349 = vsub.f32 %v277, %v323
        %v350 = vsub.f32 %v280, %v330
        %v351 = vsub.f32 %v283, %v337
        %v352 = vsub.f32 %v286, %v344
        %v353 = vmul.f32 %v345, 1.442695
        %v354 = vpow.pop %v353
        %v355 = vmul.f32 %v346, 1.442695
        %v356 = vpow.pop %v355
        %v357 = vmul.f32 %v347, 1.442695
        %v358 = vpow.pop %v357
        %v359 = vmul.f32 %v348, 1.442695
        %v360 = vpow.pop %v359
        %v361 = vmul.f32 %v349, 1.442695
        %v362 = vpow.pop %v361
        %v363 = vmul.f32 %v350, 1.442695
        %v364 = vpow.pop %v363
        %v365 = vmul.f32 %v351, 1.442695
        %v366 = vpow.pop %v365
        %v367 = vmul.f32 %v352, 1.442695
        %v368 = vpow.pop %v367
        %v369 = vsel %vm288, %v354, 0.0
        %v370 = vrot.slane %v369, 4
        %v371 = vadd.f32 %v369, %v370
        %v372 = vrot.slane %v371, 2
        %v373 = vadd.f32 %v371, %v372
        %v374 = vrot.slane %v373, 1
        %v375 = vadd.f32 %v373, %v374
        %v376 = vsel %vm288, %v356, 0.0
        %v377 = vrot.slane %v376, 4
        %v378 = vadd.f32 %v376, %v377
        %v379 = vrot.slane %v378, 2
        %v380 = vadd.f32 %v378, %v379
        %v381 = vrot.slane %v380, 1
        %v382 = vadd.f32 %v380, %v381
        %v383 = vsel %vm288, %v358, 0.0
        %v384 = vrot.slane %v383, 4
        %v385 = vadd.f32 %v383, %v384
        %v386 = vrot.slane %v385, 2
        %v387 = vadd.f32 %v385, %v386
        %v388 = vrot.slane %v387, 1
        %v389 = vadd.f32 %v387, %v388
        %v390 = vsel %vm288, %v360, 0.0
        %v391 = vrot.slane %v390, 4
        %v392 = vadd.f32 %v390, %v391
        %v393 = vrot.slane %v392, 2
        %v394 = vadd.f32 %v392, %v393
        %v395 = vrot.slane %v394, 1
        %v396 = vadd.f32 %v394, %v395
        %v397 = vsel %vm288, %v362, 0.0
        %v398 = vrot.slane %v397, 4
        %v399 = vadd.f32 %v397, %v398
        %v400 = vrot.slane %v399, 2
        %v401 = vadd.f32 %v399, %v400
        %v402 = vrot.slane %v401, 1
        %v403 = vadd.f32 %v401, %v402
        %v404 = vsel %vm288, %v364, 0.0
        %v405 = vrot.slane %v404, 4
        %v406 = vadd.f32 %v404, %v405
        %v407 = vrot.slane %v406, 2
        %v408 = vadd.f32 %v406, %v407
        %v409 = vrot.slane %v408, 1
        %v410 = vadd.f32 %v408, %v409
        %v411 = vsel %vm288, %v366, 0.0
        %v412 = vrot.slane %v411, 4
        %v413 = vadd.f32 %v411, %v412
        %v414 = vrot.slane %v413, 2
        %v415 = vadd.f32 %v413, %v414
        %v416 = vrot.slane %v415, 1
        %v417 = vadd.f32 %v415, %v416
        %v418 = vsel %vm288, %v368, 0.0
        %v419 = vrot.slane %v418, 4
        %v420 = vadd.f32 %v418, %v419
        %v421 = vrot.slane %v420, 2
        %v422 = vadd.f32 %v420, %v421
        %v423 = vrot.slane %v422, 1
        %v424 = vadd.f32 %v422, %v423
        %v425 = vlog2.pop %v375
        %v426 = vmul.f32 %v425, 0.6931472
        %v427 = vlog2.pop %v382
        %v428 = vmul.f32 %v427, 0.6931472
        %v429 = vlog2.pop %v389
        %v430 = vmul.f32 %v429, 0.6931472
        %v431 = vlog2.pop %v396
        %v432 = vmul.f32 %v431, 0.6931472
        %v433 = vlog2.pop %v403
        %v434 = vmul.f32 %v433, 0.6931472
        %v435 = vlog2.pop %v410
        %v436 = vmul.f32 %v435, 0.6931472
        %v437 = vlog2.pop %v417
        %v438 = vmul.f32 %v437, 0.6931472
        %v439 = vlog2.pop %v424
        %v440 = vmul.f32 %v439, 0.6931472
        %v441 = vadd.f32 %v426, %v295
        %v442 = vadd.f32 %v428, %v302
        %v443 = vadd.f32 %v430, %v309
        %v444 = vadd.f32 %v432, %v316
        %v445 = vadd.f32 %v434, %v323
        %v446 = vadd.f32 %v436, %v330
        %v447 = vadd.f32 %v438, %v337
        %v448 = vadd.f32 %v440, %v344
        %v449 = vmul.f32 %v209, %v217
        %v450 = vmul.f32 %v210, %v217
        %v451 = vmul.f32 %v211, %v217
        %v452 = vmul.f32 %v212, %v217
        %v453 = vmul.f32 %v213, %v217
        %v454 = vmul.f32 %v214, %v217
        %v455 = vmul.f32 %v215, %v217
        %v456 = vmul.f32 %v216, %v217
        %v457 = vsel %vm219, %v449, 0.0
        %458 = vadd.xlane.f32.xlu0 %v457
        %v459 = vpop.xlane.xlu0 %458
        %v460 = vsel %vm219, %v450, 0.0
        %461 = vadd.xlane.f32.xlu0 %v460
        %v462 = vpop.xlane.xlu0 %461
        %v463 = vsel %vm219, %v451, 0.0
        %464 = vadd.xlane.f32.xlu0 %v463
        %v465 = vpop.xlane.xlu0 %464
        %v466 = vsel %vm219, %v452, 0.0
        %467 = vadd.xlane.f32.xlu0 %v466
        %v468 = vpop.xlane.xlu0 %467
        %v469 = vsel %vm219, %v453, 0.0
        %470 = vadd.xlane.f32.xlu0 %v469
        %v471 = vpop.xlane.xlu0 %470
        %v472 = vsel %vm219, %v454, 0.0
        %473 = vadd.xlane.f32.xlu0 %v472
        %v474 = vpop.xlane.xlu0 %473
        %v475 = vsel %vm219, %v455, 0.0
        %476 = vadd.xlane.f32.xlu0 %v475
        %v477 = vpop.xlane.xlu0 %476
        %v478 = vsel %vm219, %v456, 0.0
        %479 = vadd.xlane.f32.xlu0 %v478
        %v480 = vpop.xlane.xlu0 %479
        %v489 = vlaneseq
        %v490 = vand.u32 %v489, 127
        %v491 = vperm.slane %v459, %v490
        %v492 = vperm.slane %v462, %v490
        %v493 = vperm.slane %v465, %v490
        %v494 = vperm.slane %v468, %v490
        %v495 = vperm.slane %v471, %v490
        %v496 = vperm.slane %v474, %v490
        %v497 = vperm.slane %v477, %v490
        %v498 = vperm.slane %v480, %v490
        %v507 = vsub.f32 %v441, %v491
        %v508 = vsub.f32 %v442, %v492
        %v509 = vsub.f32 %v443, %v493
        %v510 = vsub.f32 %v444, %v494
        %v511 = vsub.f32 %v445, %v495
        %v512 = vsub.f32 %v446, %v496
        %v513 = vsub.f32 %v447, %v497
        %v514 = vsub.f32 %v448, %v498
        %v516 = vrot.slane %v218, 1
        %v517 = vrot.slane %v218, 2
        %v518 = vrot.slane %v218, 3
        %v519 = vrot.slane %v218, 4
        %v520 = vrot.slane %v218, 5
        %v521 = vrot.slane %v218, 6
        %v522 = vrot.slane %v218, 7
        %v531 = vmul.f32 %v507, %v218
        %v532 = vmul.f32 %v508, %v516
        %v533 = vmul.f32 %v509, %v517
        %v534 = vmul.f32 %v510, %v518
        %v535 = vmul.f32 %v511, %v519
        %v536 = vmul.f32 %v512, %v520
        %v537 = vmul.f32 %v513, %v521
        %v538 = vmul.f32 %v514, %v522
        %v547 = vrot.slane %v532, 7
        %vm548 = vcmask 1041409
        %v549 = vsel %vm548, %v547, %v531
        %v550 = vrot.slane %v533, 6
        %vm551 = vcmask 1042434
        %v552 = vsel %vm551, %v550, %v549
        %v553 = vrot.slane %v534, 5
        %vm554 = vcmask 1043459
        %v555 = vsel %vm554, %v553, %v552
        %v556 = vrot.slane %v535, 4
        %vm557 = vcmask 1044484
        %v558 = vsel %vm557, %v556, %v555
        %v559 = vrot.slane %v536, 3
        %vm560 = vcmask 1045509
        %v561 = vsel %vm560, %v559, %v558
        %v562 = vrot.slane %v537, 2
        %vm563 = vcmask 1046534
        %v564 = vsel %vm563, %v562, %v561
        %v565 = vrot.slane %v538, 1
        %vm566 = vcmask 1047559
        %v567 = vsel %vm566, %v565, %v564
        %v569 = vsel %vm288, %v567, 0.0
        %570 = vadd.xlane.f32.xlu0 %v569
        %v571 = vpop.xlane.xlu0 %570
        %v572 = vmul.f32 %v571, 0.125
        %v573 = vsel %vm288, %v218, 0.0
        %574 = vadd.xlane.f32.xlu0 %v573
        %v575 = vpop.xlane.xlu0 %574
        %v576 = vadd.f32 %v575, 1e-08
        %v577 = vrcp.pop %v576
        %v578 = vmul.f32 %v576, %v577
        %v579 = vsub.f32 1.0, %v578
        %v580 = vmul.f32 %v577, %v579
        %v581 = vadd.f32 %v577, %v580
        %vm582 = vweird.f32 %v576
        %vm583 = vweird.f32 %v577
        %vm584 = vmor %vm582, %vm583
        %v585 = vsel %vm584, %v577, %v581
        %v586 = vand.u32 2147483647, %v576
        %vm587 = vcmp.eq.f32.partialorder %v586, 8.507059e+37
        %v588 = vand.u32 %v576, 2147483648
        %v589 = vor.u32 1.1754944e-38, %v588
        %v590 = vsel %vm587, %v589, %v585
        %v591 = vmul.f32 %v572, %v590
        %vm592 = vcmask 7168
        %593 = vst.msk [vmem:[%s208] sm:$0xff] %vm592, %v591
        %p594 = scmp.lt.s32.totalorder %s17, 2
        %s595 = scalar_select %p594, %s17, 2
        %s596 = smul.addr %s595, 8
        %s597 = scalar_lea.vmem %s3, %s596
        // Predicated region
        $region37: #{tpu_custom_call.1} parent=31 // pred_check
          %p598 = pneg %p108
        $region38: #{tpu_custom_call.1} parent=31 // pred_check_branch
          %600 = sbr.rel (%p598) target = $region40
        $region39: #{tpu_custom_call.1} parent=31 // pred_region
          _
        $region40: #{tpu_custom_call.1} parent=31 // pred_fallthru
          _
      $region32: #{tpu_custom_call.1} parent=5 // pred_fallthru
        _
      %p601 = scmp.le.s32.totalorder 2, %s12
      // Predicated region
      $region41: #{tpu_custom_call.1} parent=5 // pred_check
        %p602 = pneg %p601
      $region42: #{tpu_custom_call.1} parent=5 // pred_check_branch
        %604 = sbr.rel (%p602) target = $region44
      $region43: #{tpu_custom_call.1} parent=5 // pred_region
        %s605 = ssub.s32 %s12, 2
        // Predicated region
        $region45: #{tpu_custom_call.1} parent=43 // pred_check
          %p606 = pneg %p114
        $region46: #{tpu_custom_call.1} parent=43 // pred_check_branch
          %608 = sbr.rel (%p606) target = $region48
        $region47: #{tpu_custom_call.1} parent=43 // pred_region
          %p609 = scmp.lt.s32.totalorder %s18, 2
          %s610 = scalar_select %p609, %s18, 2
          %s611 = smul.addr %s610, 8
          %s612 = scalar_lea.vmem %s3, %s611
        $region48: #{tpu_custom_call.1} parent=43 // pred_fallthru
          _
      $region44: #{tpu_custom_call.1} parent=5 // pred_fallthru
        _
    $region6: #{tpu_custom_call.1} parent=1 // loop_footer
      %s16 = sadd.s32 1, %s12
    $region7: #{tpu_custom_call.1} parent=1 // loop_footer_branch
      %11 = sbr.rel target = $region3
    $region8: #{tpu_custom_call.1} parent=1 // loop_exit
      _
    %613 = vsyncpa [#allocation3], 1
    %s614 = scalar_lea.sflag [#allocation3], 1
    %615 = vsyncpa %s614, 1

</llo_original>
